<compile_context>
chip_gen: v5e
topology: v5e:2x2
jax: 0.10.0
libtpu: 0.0.40
codegen_flags: <defaults>
</compile_context>

<pallas_src>
import functools

import jax
import jax.numpy as jnp
from jax.experimental import pallas as pl
from jax.experimental.pallas import tpu as pltpu


def _feature_norm_kernel(x_ref, scale_ref, bias_ref, o_ref, *, eps, hw):
    # x_ref block: (1, C_TILE, HW); scale/bias block: (1, C_TILE, 1)
    x = x_ref[...].astype(jnp.float32)

    # Two-pass statistics (numerically safer than E[x^2] - mean^2).
    mean = jnp.mean(x, axis=-1, keepdims=True)
    # torch.std is unbiased (ddof=1).  (x - mean) is recomputed inside the
    # reduction so no full-tile temporary stays live into the epilogue.
    # NOTE: hw == 1 gives NaN, same as torch.std with a single element.
    var = jnp.sum(jnp.square(x - mean), axis=-1, keepdims=True) / jnp.float32(hw - 1)
    std = jnp.sqrt(var)

    # rsqrt goes to the EUP (free bundle slot) instead of a VPU divide.
    inv = jax.lax.rsqrt(std + jnp.float32(eps))
    a = scale_ref[...].astype(jnp.float32) * inv            # (1, C_TILE, 1)
    b = bias_ref[...].astype(jnp.float32) - a * mean         # (1, C_TILE, 1)

    # Single FMA per element; no diff/normed full-tile temporaries.
    o_ref[...] = (a * x + b).astype(o_ref.dtype)


def _choose_c_tile(C, HW, target_block_bytes):
    """Largest channel tile (multiple of 8, dividing C) whose (C_TILE, HW) fp32
    block fits the target; falls back to full C for small/odd channel counts."""
    if C * HW * 4 <= target_block_bytes:
        return C
    divisors = [t for t in range(8, C, 8) if C % t == 0]
    if not divisors:
        return C
    fitting = [t for t in divisors if t * HW * 4 <= target_block_bytes]
    return max(fitting) if fitting else min(divisors)


def feature_norm(x, scale, bias, eps=0.001):
    """x: (N, C, H, W) float32. scale/bias: (1, C, 1, 1) float32."""
    N, C, H, W = x.shape
    HW = H * W
    x3 = x.reshape(N, C, HW)
    scale3 = scale.reshape(1, C, 1)
    bias3 = bias.reshape(1, C, 1)

    # Keep each x block around ~2 MiB so double-buffered in+out (~4 blocks)
    # stays well inside scoped VMEM on v5e/v6e/v7x while still being large
    # enough (>=512 lanes wide) to sit near the HBM roofline.
    vmem_limit_bytes = 32 * 1024 * 1024
    target_block_bytes = 2 * 1024 * 1024
    c_tile = _choose_c_tile(C, HW, target_block_bytes)
    c_blocks = pl.cdiv(C, c_tile)

    kernel = functools.partial(_feature_norm_kernel, eps=eps, hw=HW)

    out = pl.pallas_call(
        kernel,
        out_shape=jax.ShapeDtypeStruct((N, C, HW), x.dtype),
        grid_spec=pltpu.PrefetchScalarGridSpec(
            num_scalar_prefetch=0,
            grid=(N, c_blocks),
            in_specs=[
                pl.BlockSpec((1, c_tile, HW), lambda n, c: (n, c, 0)),
                pl.BlockSpec((1, c_tile, 1), lambda n, c: (0, c, 0)),
                pl.BlockSpec((1, c_tile, 1), lambda n, c: (0, c, 0)),
            ],
            out_specs=pl.BlockSpec((1, c_tile, HW), lambda n, c: (n, c, 0)),
        ),
        compiler_params=pltpu.CompilerParams(
            dimension_semantics=("parallel", "parallel"),
            vmem_limit_bytes=vmem_limit_bytes,
        ),
    )(x3, scale3, bias3)
    return out.reshape(N, C, H, W)


def feature_norm_ref(x, scale, bias, eps=0.001):
    # Pure-JAX reference mirroring the PyTorch forward (unbiased std).
    mean = jnp.mean(x, axis=(2, 3), keepdims=True)
    var = jnp.sum((x - mean) ** 2, axis=(2, 3), keepdims=True) / (
        x.shape[2] * x.shape[3] - 1
    )
    std = jnp.sqrt(var)
    return scale * ((x - mean) / jnp.sqrt(std + eps)) + bias


if __name__ == "__main__":
    key = jax.random.PRNGKey(0)
    N, C, H, W = 2, 4, 16, 16
    x = jax.random.normal(key, (N, C, H, W), dtype=jnp.float32)

    # Deterministic parameter init matching the module's __init__:
    # scale = ones([1, C, 1, 1]), bias = zeros([1, C, 1, 1])
    scale = jnp.ones((1, C, 1, 1), dtype=jnp.float32)
    bias = jnp.zeros((1, C, 1, 1), dtype=jnp.float32)

    out = feature_norm(x, scale, bias, eps=0.001)
    out = jax.block_until_ready(out)

    ref = feature_norm_ref(x, scale, bias, eps=0.001)
    assert jnp.allclose(out, ref, atol=1e-5, rtol=1e-5), "mismatch vs reference"

    print("KERNEL_OK")
</pallas_src>

<mosaic_0001>
module attributes {stable_mosaic.version = 11 : i64} {
  func.func @_feature_norm_kernel(%arg0: i32, %arg1: i32, %arg2: memref<1x4x256xf32, #tpu.memory_space<vmem>>, %arg3: memref<1x4x1xf32, #tpu.memory_space<vmem>>, %arg4: memref<1x4x1xf32, #tpu.memory_space<vmem>>, %arg5: memref<1x4x256xf32, #tpu.memory_space<vmem>>) attributes {dimension_semantics = [#tpu.dimension_semantics<parallel>, #tpu.dimension_semantics<parallel>], iteration_bounds = array<i64: 2, 1>, scalar_prefetch = 0 : i64, scratch_operands = 0 : i64, tpu.core_type = #tpu.core_type<tc>, window_params = [{transform_indices = @transform_0, window_bounds = array<i64: 1, 4, 256>}, {transform_indices = @transform_1, window_bounds = array<i64: 1, 4, 1>}, {transform_indices = @transform_2, window_bounds = array<i64: 1, 4, 1>}, {transform_indices = @transform_3, window_bounds = array<i64: 1, 4, 256>}]} {
    %c0 = arith.constant 0 : index
    %c0_0 = arith.constant 0 : index
    %c0_1 = arith.constant 0 : index
    %0 = vector.load %arg2[%c0, %c0_0, %c0_1] : memref<1x4x256xf32, #tpu.memory_space<vmem>>, vector<1x4x256xf32>
    %cst = arith.constant dense<0.000000e+00> : vector<1x4xf32>
    %1 = vector.multi_reduction <add>, %0, %cst [2] : vector<1x4x256xf32> to vector<1x4xf32>
    %2 = vector.shape_cast %1 : vector<1x4xf32> to vector<1x4x1xf32>
    %cst_2 = arith.constant 2.560000e+02 : f32
    %3 = vector.broadcast %cst_2 : f32 to vector<1x4x1xf32>
    %4 = arith.divf %2, %3 : vector<1x4x1xf32>
    %5 = vector.broadcast %4 : vector<1x4x1xf32> to vector<1x4x256xf32>
    %6 = arith.subf %0, %5 : vector<1x4x256xf32>
    %7 = arith.mulf %6, %6 : vector<1x4x256xf32>
    %cst_3 = arith.constant dense<0.000000e+00> : vector<1x4xf32>
    %8 = vector.multi_reduction <add>, %7, %cst_3 [2] : vector<1x4x256xf32> to vector<1x4xf32>
    %9 = vector.shape_cast %8 : vector<1x4xf32> to vector<1x4x1xf32>
    %cst_4 = arith.constant 2.550000e+02 : f32
    %10 = vector.broadcast %cst_4 : f32 to vector<1x4x1xf32>
    %11 = arith.divf %9, %10 : vector<1x4x1xf32>
    %12 = math.sqrt %11 : vector<1x4x1xf32>
    %cst_5 = arith.constant 1.000000e-03 : f32
    %13 = vector.broadcast %cst_5 : f32 to vector<1x4x1xf32>
    %14 = arith.addf %12, %13 : vector<1x4x1xf32>
    %15 = math.rsqrt %14 : vector<1x4x1xf32>
    %c0_6 = arith.constant 0 : index
    %c0_7 = arith.constant 0 : index
    %c0_8 = arith.constant 0 : index
    %16 = vector.load %arg3[%c0_6, %c0_7, %c0_8] : memref<1x4x1xf32, #tpu.memory_space<vmem>>, vector<1x4x1xf32>
    %17 = arith.mulf %16, %15 : vector<1x4x1xf32>
    %c0_9 = arith.constant 0 : index
    %c0_10 = arith.constant 0 : index
    %c0_11 = arith.constant 0 : index
    %18 = vector.load %arg4[%c0_9, %c0_10, %c0_11] : memref<1x4x1xf32, #tpu.memory_space<vmem>>, vector<1x4x1xf32>
    %19 = arith.mulf %17, %4 : vector<1x4x1xf32>
    %20 = arith.subf %18, %19 : vector<1x4x1xf32>
    %21 = vector.broadcast %17 : vector<1x4x1xf32> to vector<1x4x256xf32>
    %22 = arith.mulf %21, %0 : vector<1x4x256xf32>
    %23 = vector.broadcast %20 : vector<1x4x1xf32> to vector<1x4x256xf32>
    %24 = arith.addf %22, %23 : vector<1x4x256xf32>
    %c0_12 = arith.constant 0 : index
    %c0_13 = arith.constant 0 : index
    %c0_14 = arith.constant 0 : index
    %25 = vector.load %arg5[%c0_12, %c0_13, %c0_14] : memref<1x4x256xf32, #tpu.memory_space<vmem>>, vector<1x4x256xf32>
    tpu.vector_store %arg5[%c0_12, %c0_13, %c0_14], %24 {strides = array<i32>} : memref<1x4x256xf32, #tpu.memory_space<vmem>>, vector<1x4x256xf32>,
    return
  }
  func.func @transform_0(%arg0: i32, %arg1: i32) -> (i32, i32, i32) {
    %c0_i32 = arith.constant 0 : i32
    %c0_i32_0 = arith.constant 0 : i32
    return %arg0, %arg1, %c0_i32 : i32, i32, i32
  }
  func.func @transform_1(%arg0: i32, %arg1: i32) -> (i32, i32, i32) {
    %c0_i32 = arith.constant 0 : i32
    %c0_i32_0 = arith.constant 0 : i32
    %c0_i32_1 = arith.constant 0 : i32
    return %c0_i32, %arg1, %c0_i32_0 : i32, i32, i32
  }
  func.func @transform_2(%arg0: i32, %arg1: i32) -> (i32, i32, i32) {
    %c0_i32 = arith.constant 0 : i32
    %c0_i32_0 = arith.constant 0 : i32
    %c0_i32_1 = arith.constant 0 : i32
    return %c0_i32, %arg1, %c0_i32_0 : i32, i32, i32
  }
  func.func @transform_3(%arg0: i32, %arg1: i32) -> (i32, i32, i32) {
    %c0_i32 = arith.constant 0 : i32
    %c0_i32_0 = arith.constant 0 : i32
    return %arg0, %arg1, %c0_i32 : i32, i32, i32
  }
}

</mosaic_0001>

<llo_original>
// kernel: tpu_custom_call.1
$region0: #{tpu_custom_call.1}
  #allocation0 [shape = 'u32[]', space=smem, size = 0x4, offset = 0x4, fixed_abs, tag = 'smem constant byte address 0x4 - core index']
  #allocation1 [shape = 'u32[72,128]{1,0:T(1,128)}', space=vmem, size = 0x9000, scoped, tag = 'internal scratch']
  %s0 = inlined_call_operand.hbm [shape: f32[2,4,256], index: 0, kind: input, shape index: {}]
  %s1 = inlined_call_operand.vmem [shape: f32[1,4,1], index: 1, kind: input, shape index: {}]
  %s2 = inlined_call_operand.vmem [shape: f32[1,4,1], index: 2, kind: input, shape index: {}]
  %s3 = inlined_call_operand.hbm [shape: f32[2,4,256], index: 3, kind: output, shape index: {}]
  %s4 = sld [smem:[#allocation0]]
  $region49: #{tpu_custom_call.1} parent=0
    _
  %s6 = ssub.s32 1, %s4
  %s7 = scalar_select 0, %s6, %s4
  $region1: #{tpu_custom_call.1} parent=0
    #allocation2 [shape = 'u8[8192]{0}', space=vmem, size = 0x2000, scoped, tag = 'input window, operand 0']
    #allocation3 [shape = 's32[2]{0}', space=sflag, size = 0x8, scoped, tag = 'scoped memory for tpu_custom_call.1']
    #allocation4 [shape = 's32[2]{0}', space=sflag, size = 0x8, scoped, tag = 'scoped memory for tpu_custom_call.1']
    #allocation5 [shape = 'u8[8192]{0}', space=vmem, size = 0x2000, scoped, tag = 'output window, operand 0']
    %8 = vsyncpa [#allocation3], 0
    %s9 = scalar_lea.sflag [#allocation3], 1
    %10 = vsyncpa %s9, 0
    %11 = vsyncpa [#allocation4], 0
    %s12 = scalar_lea.sflag [#allocation4], 1
    %13 = vsyncpa %s12, 0
    loop: start=0, step=1, limit=4
    $region2: #{tpu_custom_call.1} parent=1 // loop_pre_header
      _
    $region3: #{tpu_custom_call.1} parent=1 // loop_header
      %s15 = sphi 0, %s19
      %p16 = scmp.ge.s32.totalorder %s15, 4
      %s22 = sphi 0, %s34
      %s23 = sphi 0, %s30
      %s24 = sphi 0, %s22
      %s25 = sphi 0, %s23
      %s26 = sphi 0, %s24
      %s27 = sphi 0, %s25
      %s39 = sphi 0, %s41
      %s42 = sphi 0, %s39
      %s43 = sphi 0, %s42
      %s59 = sphi 0, %s43
      %s65 = sphi 0, %s67
      %s68 = sphi 0, %s65
      %s69 = sphi 0, %s68
      %s85 = sphi 0, %s69
      %s91 = sphi 0, %s93
      %s94 = sphi 0, %s91
      %s95 = sphi 0, %s94
      %s111 = sphi 0, %s95
      %s119 = sphi 0, %s121
      %s122 = sphi 0, %s119
      %s123 = sphi 0, %s122
      %s139 = sphi 0, %s123
    $region4: #{tpu_custom_call.1} parent=1 // loop_header_branch
      %18 = sbr.rel (%p16) target = $region8
    $region5: #{tpu_custom_call.1} parent=1 // loop_body
      %s20 = ssub.s32 %s15, 1
      %s21 = ssub.s32 %s15, 2
      %s28 = sadd.s32 1, %s23
      %p29 = scmp.ge.s32.totalorder %s28, 1
      %s30 = scalar_select %p29, 0, %s28
      %s31 = sadd.s32 1, %s22
      %s32 = scalar_select %p29, %s31, %s22
      %p33 = scmp.ge.s32.totalorder %s32, 2
      %s34 = scalar_select %p33, 0, %s32
      %s35 = ssub.s32 %s22, %s34
      %s36 = ssub.s32 %s23, %s30
      %s37 = sor.u32 %s35, %s36
      %p38 = scmp.eq.s32.totalorder %s37, 0
      %s40 = sadd.s32 %s39, 1
      %s41 = scalar_select %p38, %s39, %s40
      %p44 = pneg %p38
      %p45 = scmp.eq.s32.totalorder %s15, 1
      %p46 = por %p44, %p45
      %p47 = scmp.ne.s32.totalorder %s39, %s42
      %p48 = scmp.eq.s32.totalorder %s15, 0
      %p49 = por %p47, %p48
      %p50 = scmp.ne.s32.totalorder %s39, %s42
      %p51 = scmp.eq.s32.totalorder %s20, 1
      %p52 = por %p50, %p51
      %p53 = scmp.ne.s32.totalorder %s42, %s43
      %p54 = scmp.eq.s32.totalorder %s20, 0
      %p55 = por %p53, %p54
      %p56 = scmp.ne.s32.totalorder %s42, %s43
      %p57 = scmp.eq.s32.totalorder %s21, 1
      %p58 = por %p56, %p57
      %p60 = scmp.ne.s32.totalorder %s43, %s59
      %p61 = scmp.eq.s32.totalorder %s21, 0
      %p62 = por %p60, %p61
      %s63 = ssub.s32 %s23, %s30
      %p64 = scmp.eq.s32.totalorder %s63, 0
      %s66 = sadd.s32 %s65, 1
      %s67 = scalar_select %p64, %s65, %s66
      %p70 = pneg %p64
      %p71 = scmp.eq.s32.totalorder %s15, 1
      %p72 = por %p70, %p71
      %p73 = scmp.ne.s32.totalorder %s65, %s68
      %p74 = scmp.eq.s32.totalorder %s15, 0
      %p75 = por %p73, %p74
      %p76 = scmp.ne.s32.totalorder %s65, %s68
      %p77 = scmp.eq.s32.totalorder %s20, 1
      %p78 = por %p76, %p77
      %p79 = scmp.ne.s32.totalorder %s68, %s69
      %p80 = scmp.eq.s32.totalorder %s20, 0
      %p81 = por %p79, %p80
      %p82 = scmp.ne.s32.totalorder %s68, %s69
      %p83 = scmp.eq.s32.totalorder %s21, 1
      %p84 = por %p82, %p83
      %p86 = scmp.ne.s32.totalorder %s69, %s85
      %p87 = scmp.eq.s32.totalorder %s21, 0
      %p88 = por %p86, %p87
      %s89 = ssub.s32 %s23, %s30
      %p90 = scmp.eq.s32.totalorder %s89, 0
      %s92 = sadd.s32 %s91, 1
      %s93 = scalar_select %p90, %s91, %s92
      %p96 = pneg %p90
      %p97 = scmp.eq.s32.totalorder %s15, 1
      %p98 = por %p96, %p97
      %p99 = scmp.ne.s32.totalorder %s91, %s94
      %p100 = scmp.eq.s32.totalorder %s15, 0
      %p101 = por %p99, %p100
      %p102 = scmp.ne.s32.totalorder %s91, %s94
      %p103 = scmp.eq.s32.totalorder %s20, 1
      %p104 = por %p102, %p103
      %p105 = scmp.ne.s32.totalorder %s94, %s95
      %p106 = scmp.eq.s32.totalorder %s20, 0
      %p107 = por %p105, %p106
      %p108 = scmp.ne.s32.totalorder %s94, %s95
      %p109 = scmp.eq.s32.totalorder %s21, 1
      %p110 = por %p108, %p109
      %p112 = scmp.ne.s32.totalorder %s95, %s111
      %p113 = scmp.eq.s32.totalorder %s21, 0
      %p114 = por %p112, %p113
      %s115 = ssub.s32 %s22, %s34
      %s116 = ssub.s32 %s23, %s30
      %s117 = sor.u32 %s115, %s116
      %p118 = scmp.eq.s32.totalorder %s117, 0
      %s120 = sadd.s32 %s119, 1
      %s121 = scalar_select %p118, %s119, %s120
      %p124 = pneg %p118
      %p125 = scmp.eq.s32.totalorder %s15, 1
      %p126 = por %p124, %p125
      %p127 = scmp.ne.s32.totalorder %s119, %s122
      %p128 = scmp.eq.s32.totalorder %s15, 0
      %p129 = por %p127, %p128
      %p130 = scmp.ne.s32.totalorder %s119, %s122
      %p131 = scmp.eq.s32.totalorder %s20, 1
      %p132 = por %p130, %p131
      %p133 = scmp.ne.s32.totalorder %s122, %s123
      %p134 = scmp.eq.s32.totalorder %s20, 0
      %p135 = por %p133, %p134
      %p136 = scmp.ne.s32.totalorder %s122, %s123
      %p137 = scmp.eq.s32.totalorder %s21, 1
      %p138 = por %p136, %p137
      %p140 = scmp.ne.s32.totalorder %s123, %s139
      %p141 = scmp.eq.s32.totalorder %s21, 0
      %p142 = por %p140, %p141
      %p143 = scmp.le.s32.totalorder 1, %s15
      %p144 = scmp.lt.s32.totalorder %s15, 3
      %p145 = pnand %p143, %p144
      %p146 = pneg %p145
      // Predicated region
      $region9: #{tpu_custom_call.1} parent=5 // pred_check
        _
      $region10: #{tpu_custom_call.1} parent=5 // pred_check_branch
        %148 = sbr.rel (%p145) target = $region12
      $region11: #{tpu_custom_call.1} parent=5 // pred_region
        %s149 = ssub.s32 %s15, 1
        // Predicated region
        $region13: #{tpu_custom_call.1} parent=11 // pred_check
          %p150 = pneg %p81
        $region14: #{tpu_custom_call.1} parent=11 // pred_check_branch
          %152 = sbr.rel (%p150) target = $region16
        $region15: #{tpu_custom_call.1} parent=11 // pred_region
          %p153 = scmp.lt.s32.totalorder %s25, 0
          %s154 = scalar_select %p153, %s25, 0
          %s155 = smul.addr %s154, 4
          %s156 = scalar_lea.vmem %s1, %s155
        $region16: #{tpu_custom_call.1} parent=11 // pred_fallthru
          _
        // Predicated region
        $region17: #{tpu_custom_call.1} parent=11 // pred_check
          %p157 = pneg %p107
        $region18: #{tpu_custom_call.1} parent=11 // pred_check_branch
          %159 = sbr.rel (%p157) target = $region20
        $region19: #{tpu_custom_call.1} parent=11 // pred_region
          %p160 = scmp.lt.s32.totalorder %s25, 0
          %s161 = scalar_select %p160, %s25, 0
          %s162 = smul.addr %s161, 4
          %s163 = scalar_lea.vmem %s2, %s162
        $region20: #{tpu_custom_call.1} parent=11 // pred_fallthru
          _
      $region12: #{tpu_custom_call.1} parent=5 // pred_fallthru
        _
      %p164 = scmp.lt.s32.totalorder %s15, 2
      // Predicated region
      $region21: #{tpu_custom_call.1} parent=5 // pred_check
        %p165 = pneg %p164
      $region22: #{tpu_custom_call.1} parent=5 // pred_check_branch
        %167 = sbr.rel (%p165) target = $region24
      $region23: #{tpu_custom_call.1} parent=5 // pred_region
        // Predicated region
        $region25: #{tpu_custom_call.1} parent=23 // pred_check
          %p168 = pneg %p49
        $region26: #{tpu_custom_call.1} parent=23 // pred_check_branch
          %170 = sbr.rel (%p168) target = $region28
        $region27: #{tpu_custom_call.1} parent=23 // pred_region
          %s171 = sand.u32 %s39, 1
          %s172 = scalar_lea.sflag [#allocation3], %s171
          %s173 = sand.u32 %s39, 1
          %s174 = smul.addr %s173, 8
          %s175 = scalar_lea.vmem [#allocation2], %s174
          %177 = vsyncadd %s172, 0
          %s178 = smul.addr %s23, 2
          %s179 = smul.addr %s22, 2
          %s180 = sadd.s32 %s178, %s179
          %s181 = smul.addr %s180, 4
          %s182 = scalar_lea.hbm %s0, %s181
          %s184 = sshll.u32 %s182, 4
          %s185 = int_to_ptr.hbm [resolvable:$true] %s184
          %s186 = sshll.u32 %s175, 4
          %s187 = int_to_ptr.vmem [resolvable:$true] %s186
          %189 = dma.hbm_to_vmem [thread:$0]  %s185, 128, %s187, %s172
        $region28: #{tpu_custom_call.1} parent=23 // pred_fallthru
          _
      $region24: #{tpu_custom_call.1} parent=5 // pred_fallthru
        _
      %p190 = scmp.le.s32.totalorder 1, %s15
      %p191 = scmp.lt.s32.totalorder %s15, 3
      %p192 = pnand %p190, %p191
      %p193 = pneg %p192
      // Predicated region
      $region29: #{tpu_custom_call.1} parent=5 // pred_check
        _
      $region30: #{tpu_custom_call.1} parent=5 // pred_check_branch
        %195 = sbr.rel (%p192) target = $region32
      $region31: #{tpu_custom_call.1} parent=5 // pred_region
        %s196 = ssub.s32 %s15, 1
        %s197 = sand.u32 %s42, 1
        %s198 = scalar_lea.sflag [#allocation3], %s197
        %s199 = sand.u32 %s42, 1
        %s200 = smul.addr %s199, 8
        %s201 = scalar_lea.vmem [#allocation2], %s200
        // Predicated region
        $region33: #{tpu_custom_call.1} parent=31 // pred_check
          %p202 = pneg %p55
        $region34: #{tpu_custom_call.1} parent=31 // pred_check_branch
          %204 = sbr.rel (%p202) target = $region36
        $region35: #{tpu_custom_call.1} parent=31 // pred_region
          %206 = dma.done %s198, 128
        $region36: #{tpu_custom_call.1} parent=31 // pred_fallthru
          _
        %s207 = sand.u32 %s42, 1
        %s208 = scalar_lea.sflag [#allocation3], %s207
        %s209 = sand.u32 %s42, 1
        %s210 = smul.addr %s209, 8
        %s211 = scalar_lea.vmem [#allocation2], %s210
        %p212 = pneg %p55
        %p213 = pneg %p52
        %p214 = scmp.lt.s32.totalorder %s25, 0
        %s215 = scalar_select %p214, %s25, 0
        %s216 = smul.addr %s215, 4
        %s217 = scalar_lea.vmem %s1, %s216
        %p218 = pneg %p81
        %p219 = pneg %p78
        %p220 = scmp.lt.s32.totalorder %s25, 0
        %s221 = scalar_select %p220, %s25, 0
        %s222 = smul.addr %s221, 4
        %s223 = scalar_lea.vmem %s2, %s222
        %p224 = pneg %p107
        %p225 = pneg %p104
        %p226 = pneg %p135
        %p227 = pneg %p132
        %s228 = sand.u32 %s122, 1
        %s229 = scalar_lea.sflag [#allocation4], %s228
        %s230 = sand.u32 %s122, 1
        %s231 = smul.addr %s230, 8
        %s232 = scalar_lea.vmem [#allocation5], %s231
        %p233 = scmp.lt.s32.totalorder %s25, 0
        %s234 = scalar_select %p233, %s25, 0
        %s235 = smul.addr %s234, 4
        %s236 = scalar_lea.vmem %s1, %s235
        %p237 = scmp.lt.s32.totalorder %s25, 0
        %s238 = scalar_select %p237, %s25, 0
        %s239 = smul.addr %s238, 4
        %s240 = scalar_lea.vmem %s2, %s239
        %v241 = vld [vmem:[%s201] sm:$0xff]
        %243 = vst [vmem:[#allocation1] ss:$2 sm:$0xff] %v241
        %v244 = vld.sshfl [vmem:[#allocation1] sm:$0xff pattern:$0x75316420]
        %v245 = vld.sshfl [vmem:[#allocation1 + $0x8] sm:$0xff pattern:$0x75316420]
        %vm248 = vcmask 1043456
        %v249 = vsel %vm248, %v244, 0.0
        %v250 = vsel %vm248, %v245, 0.0
        %v251 = vadd.f32 %v249, %v250
        %252 = vadd.xlane.f32.xlu0 %v251
        %v253 = vpop.xlane.xlu0 %252
        %v254 = vrcp.pop 256.0
        %v255 = vmul.f32 256.0, %v254
        %v256 = vsub.f32 1.0, %v255
        %v257 = vmul.f32 %v254, %v256
        %v258 = vadd.f32 %v254, %v257
        %vm259 = vweird.f32 %v254
        %v260 = vsel %vm259, %v254, %v258
        %v261 = vmul.f32 %v253, %v260
        %v264 = vunpack.c.l.s4 839922192
        %v265 = vunpack.c.0.s8 %v264
        %v266 = vperm.slane %v261, %v265
        %v268 = vsub.f32 %v241, %v266
        %v269 = vmul.f32 %v268, %v268
        %271 = vst [vmem:[#allocation1] ss:$2 sm:$0xff] %v269
        %v272 = vld.sshfl [vmem:[#allocation1] sm:$0xff pattern:$0x75316420]
        %v273 = vld.sshfl [vmem:[#allocation1 + $0x8] sm:$0xff pattern:$0x75316420]
        %v276 = vsel %vm248, %v272, 0.0
        %v277 = vsel %vm248, %v273, 0.0
        %v278 = vadd.f32 %v276, %v277
        %279 = vadd.xlane.f32.xlu0 %v278
        %v280 = vpop.xlane.xlu0 %279
        %v281 = vrcp.pop 255.0
        %v282 = vmul.f32 255.0, %v281
        %v283 = vsub.f32 1.0, %v282
        %v284 = vmul.f32 %v281, %v283
        %v285 = vadd.f32 %v281, %v284
        %vm286 = vweird.f32 %v281
        %v287 = vsel %vm286, %v281, %v285
        %v288 = vmul.f32 %v280, %v287
        %v289 = vrsqrt.pop %v288
        %v290 = vmul.f32 %v289, %v288
        %v291 = vmul.f32 %v290, %v289
        %v292 = vmul.f32 0.5, %v291
        %v293 = vsub.f32 1.5, %v292
        %v294 = vmul.f32 %v289, %v293
        %v295 = vmul.f32 %v288, %v294
        %vm296 = vcmp.eq.f32.partialorder %v288, inf
        %v297 = vsel %vm296, %v288, %v295
        %vm298 = vcmp.eq.f32.partialorder %v288, 0.0
        %v299 = vand.u32 %v288, 2147483648
        %v300 = vsel %vm298, %v299, %v297
        %v301 = vadd.f32 %v300, 0.001
        %v302 = vrsqrt.pop %v301
        %v303 = vmul.f32 %v302, %v301
        %v304 = vmul.f32 %v303, %v302
        %v305 = vmul.f32 0.5, %v304
        %v306 = vsub.f32 1.5, %v305
        %v307 = vmul.f32 %v302, %v306
        %vm308 = vweird.f32 %v301
        %vm309 = vweird.f32 %v302
        %vm310 = vmor %vm308, %vm309
        %v311 = vsel %vm310, %v302, %v307
        %v312 = vld [vmem:[%s236] sm:$0xf]
        %v313 = vmul.f32 %v312, %v311
        %v314 = vld [vmem:[%s240] sm:$0xf]
        %v315 = vmul.f32 %v313, %v261
        %v316 = vsub.f32 %v314, %v315
        %318 = vset.pattern.permute.xlu0 0
        %319 = vperm.xlu0 %318, %v313
        %v320 = vpop.permute.xlu0 %319
        %322 = vst [vmem:[#allocation1] ss:$2 sm:$0xff] %v241
        %v323 = vld.sshfl [vmem:[#allocation1] sm:$0xff pattern:$0x75316420]
        %v324 = vld.sshfl [vmem:[#allocation1 + $0x8] sm:$0xff pattern:$0x75316420]
        %v327 = vmul.f32 %v320, %v323
        %v328 = vmul.f32 %v320, %v324
        %330 = vset.pattern.permute.xlu0 0
        %331 = vperm.xlu0 %330, %v316
        %v332 = vpop.permute.xlu0 %331
        %v334 = vadd.f32 %v327, %v332
        %v335 = vadd.f32 %v328, %v332
        %v338 = vrot.slane %v335, 4
        %v339 = vsel %vm248, %v334, %v338
        %341 = vst [vmem:[%s232] sm:$0xff] %v339
        %s342 = sand.u32 %s122, 1
        %s343 = scalar_lea.sflag [#allocation4], %s342
        %s344 = sand.u32 %s122, 1
        %s345 = smul.addr %s344, 8
        %s346 = scalar_lea.vmem [#allocation5], %s345
        // Predicated region
        $region37: #{tpu_custom_call.1} parent=31 // pred_check
          %p347 = pneg %p132
        $region38: #{tpu_custom_call.1} parent=31 // pred_check_branch
          %349 = sbr.rel (%p347) target = $region40
        $region39: #{tpu_custom_call.1} parent=31 // pred_region
          %351 = vsyncadd %s343, 0
          %s352 = smul.addr %s25, 2
          %s353 = smul.addr %s24, 2
          %s354 = sadd.s32 %s352, %s353
          %s355 = smul.addr %s354, 4
          %s356 = scalar_lea.hbm %s3, %s355
          %s358 = sshll.u32 %s346, 4
          %s359 = int_to_ptr.vmem [resolvable:$true] %s358
          %s360 = sshll.u32 %s356, 4
          %s361 = int_to_ptr.hbm [resolvable:$true] %s360
          %363 = dma.vmem_to_hbm [thread:$0]  %s359, 128, %s361, %s343
        $region40: #{tpu_custom_call.1} parent=31 // pred_fallthru
          _
      $region32: #{tpu_custom_call.1} parent=5 // pred_fallthru
        _
      %p364 = scmp.le.s32.totalorder 2, %s15
      // Predicated region
      $region41: #{tpu_custom_call.1} parent=5 // pred_check
        %p365 = pneg %p364
      $region42: #{tpu_custom_call.1} parent=5 // pred_check_branch
        %367 = sbr.rel (%p365) target = $region44
      $region43: #{tpu_custom_call.1} parent=5 // pred_region
        %s368 = ssub.s32 %s15, 2
        // Predicated region
        $region45: #{tpu_custom_call.1} parent=43 // pred_check
          %p369 = pneg %p138
        $region46: #{tpu_custom_call.1} parent=43 // pred_check_branch
          %371 = sbr.rel (%p369) target = $region48
        $region47: #{tpu_custom_call.1} parent=43 // pred_region
          %s372 = sand.u32 %s123, 1
          %s373 = scalar_lea.sflag [#allocation4], %s372
          %s374 = sand.u32 %s123, 1
          %s375 = smul.addr %s374, 8
          %s376 = scalar_lea.vmem [#allocation5], %s375
          %378 = dma.done %s373, 128
        $region48: #{tpu_custom_call.1} parent=43 // pred_fallthru
          _
      $region44: #{tpu_custom_call.1} parent=5 // pred_fallthru
        _
    $region6: #{tpu_custom_call.1} parent=1 // loop_footer
      %s19 = sadd.s32 1, %s15
    $region7: #{tpu_custom_call.1} parent=1 // loop_footer_branch
      %14 = sbr.rel target = $region3
    $region8: #{tpu_custom_call.1} parent=1 // loop_exit
      _
    %379 = vsyncpa [#allocation3], 1
    %s380 = scalar_lea.sflag [#allocation3], 1
    %381 = vsyncpa %s380, 1
    %382 = vsyncpa [#allocation4], 1
    %s383 = scalar_lea.sflag [#allocation4], 1
    %384 = vsyncpa %s383, 1

</llo_original>
